<compile_context>
chip_gen: v7x
topology: tpu7x:2x2x1
jax: 0.10.0
libtpu: 0.0.40
codegen_flags: <defaults>
</compile_context>

<pallas_src>
import functools

import jax
import jax.numpy as jnp
from jax.experimental import pallas as pl
from jax.experimental.pallas import tpu as pltpu


def _round_up(n: int, m: int) -> int:
    return (n + m - 1) // m * m


def _ensemble_kernel(x_ref,      # [TB, D_in_p]        compute dtype
                     w1p_ref,    # [D_in_p, KH_p]      lane-packed W1, compute dtype
                     b1p_ref,    # [1, KH_p]           f32
                     w2p_ref,    # [KH_p, D_out_p]     weight-scaled, lane-packed W2
                     b2e_ref,    # [1, D_out_p]        f32, precomputed sum_k w_k*b2_k
                     o_ref,      # [TB, D_out_p]
                     *, tanh_dtype):
    # Hidden layer for ALL members in one MXU matmul:  [TB,D_in_p] @ [D_in_p,K*H].
    acc = jnp.dot(x_ref[...], w1p_ref[...],
                  preferred_element_type=jnp.float32) + b1p_ref[...]
    # tanh in compute dtype (bf16 on v6e/v7x: EUP is the saturating slot here).
    h = jnp.tanh(acc.astype(tanh_dtype))
    # Ensemble weights are pre-folded into w2p, so this single matmul performs
    # both "@ W2_k" and "sum_k weight_k * ..." over the packed K*H axis.
    y = jnp.dot(h.astype(w2p_ref.dtype), w2p_ref[...],
                preferred_element_type=jnp.float32)
    o_ref[...] = (y + b2e_ref[...]).astype(o_ref.dtype)


def function_ensemble_forward(x, w1, b1, w2, b2, weights,
                              *, compute_dtype=jnp.bfloat16, block_b=512,
                              out_dtype=jnp.float32, tanh_dtype=None):
    """y = sum_k weights[k] * f_k(x),  f_k(x) = tanh(x@W1_k+b1_k)@W2_k + b2_k.

    x: [B, D_in]; w1: [K, D_in, H]; b1: [K, 1, H]; w2: [K, H, D_out];
    b2: [K, 1, D_out]; weights: [K].  Returns [B, D_out] (out_dtype).
    On v5e pass tanh_dtype=jnp.float32 (no bf16 EUP there).
    """
    K, D_in, H = w1.shape
    D_out = w2.shape[-1]
    B = x.shape[0]
    f32 = jnp.float32
    if tanh_dtype is None:
        tanh_dtype = compute_dtype

    LANE = 128
    itemsize_c = jnp.dtype(compute_dtype).itemsize
    SUB = 8 * (4 // itemsize_c)            # 8 for f32, 16 for bf16 sublane packing
    KH = K * H
    KH_p = _round_up(KH, LANE)             # lane-packed hidden width
    D_in_p = _round_up(D_in, LANE)         # lane-dense contraction dim
    D_out_p = _round_up(D_out, LANE)       # lane-dense output width

    # Batch tile: multiple of SUB; for large B prefer 256-aligned tiles and keep
    # the grid >= 2 steps so both v7x TensorCores get work.
    cand = _round_up(B, SUB)
    if cand <= block_b:
        TB = cand
    else:
        half = _round_up(-(-cand // 2), 256)
        TB = _round_up(min(block_b, half), SUB)
    B_p = _round_up(B, TB)

    # ---- wrapper-side layout plumbing (zero-padded so extras contribute 0) --
    # W1: [K, D_in, H] -> [D_in_p, K*H]_p   (member k, hidden h -> column k*H + h)
    w1p = jnp.transpose(w1, (1, 0, 2)).reshape(D_in, KH)
    w1p = jnp.pad(w1p, ((0, D_in_p - D_in), (0, KH_p - KH))).astype(compute_dtype)
    b1p = jnp.pad(b1.reshape(1, KH), ((0, 0), (0, KH_p - KH))).astype(f32)
    # Fold ensemble weights into W2 (scale in f32 FIRST, then cast):
    # W2_scaled[k*H+h, :] = weights[k] * W2[k, h, :]
    w2s = (weights.astype(f32)[:, None, None] * w2.astype(f32)).reshape(KH, D_out)
    w2p = jnp.pad(w2s, ((0, KH_p - KH), (0, D_out_p - D_out))).astype(compute_dtype)
    # Precomputed weighted bias:  sum_k weights[k] * b2[k]  (exact f32 identity).
    b2e = (weights.astype(f32) @ b2.reshape(K, D_out).astype(f32)).reshape(1, D_out)
    b2e = jnp.pad(b2e, ((0, 0), (0, D_out_p - D_out)))
    # Batch / D_in padding and compute dtype.
    xp = jnp.pad(x, ((0, B_p - B), (0, D_in_p - D_in))).astype(compute_dtype)

    # Advisory cost for XLA's scheduler around the custom call.
    cost = pl.CostEstimate(
        flops=2 * B_p * KH_p * (D_in_p + D_out_p),
        transcendentals=B_p * KH_p,
        bytes_accessed=(B_p * D_in_p * itemsize_c
                        + D_in_p * KH_p * itemsize_c
                        + KH_p * 4
                        + KH_p * D_out_p * itemsize_c
                        + D_out_p * 4
                        + B_p * D_out_p * jnp.dtype(out_dtype).itemsize),
    )

    kernel = functools.partial(_ensemble_kernel, tanh_dtype=tanh_dtype)
    grid = (B_p // TB,)

    def _make_call(weight_kw):
        in_specs = [
            pl.BlockSpec((TB, D_in_p),      lambda i: (i, 0)),
            pl.BlockSpec((D_in_p, KH_p),    lambda i: (0, 0), **weight_kw),
            pl.BlockSpec((1, KH_p),         lambda i: (0, 0), **weight_kw),
            pl.BlockSpec((KH_p, D_out_p),   lambda i: (0, 0), **weight_kw),
            pl.BlockSpec((1, D_out_p),      lambda i: (0, 0), **weight_kw),
        ]
        return pl.pallas_call(
            kernel,
            out_shape=jax.ShapeDtypeStruct((B_p, D_out_p), out_dtype),
            grid=grid,
            in_specs=in_specs,
            out_specs=pl.BlockSpec((TB, D_out_p), lambda i: (i, 0)),
            compiler_params=pltpu.CompilerParams(
                dimension_semantics=("parallel",),   # batch axis -> both TCs on v7x
                vmem_limit_bytes=48 * 1024 * 1024,   # headroom on v7x's 64 MiB VMEM
            ),
            cost_estimate=cost,
        )

    try:
        # Single-buffer the grid-invariant weight blocks (constant index_map):
        # they are fetched once, so this just halves their VMEM footprint.
        out = _make_call(dict(pipeline_mode=pl.Buffered(1)))(xp, w1p, b1p, w2p, b2e)
    except Exception:
        # Fallback for JAX versions that reject buffer_count=1.
        out = _make_call({})(xp, w1p, b1p, w2p, b2e)

    return out[:B, :D_out]


def _reference(x, w1, b1, w2, b2, weights):
    y = jnp.zeros((x.shape[0], w2.shape[-1]), jnp.float32)
    for k in range(w1.shape[0]):
        f = jnp.tanh(x @ w1[k] + b1[k]) @ w2[k] + b2[k]
        y = y + weights[k] * f
    return y


if __name__ == "__main__":
    # K=4 members (so K*H packs exactly to one 128-lane tile), B=8, D=H=32.
    K, B, D_in, H, D_out = 4, 8, 32, 32, 32

    key = jax.random.PRNGKey(0)
    kx, k1, k2, k3, k4, k5 = jax.random.split(key, 6)

    x = jax.random.normal(kx, (B, D_in), jnp.float32)
    w1 = jax.random.normal(k1, (K, D_in, H), jnp.float32) * 0.1
    b1 = jax.random.normal(k2, (K, 1, H), jnp.float32) * 0.1
    w2 = jax.random.normal(k3, (K, H, D_out), jnp.float32) * 0.1
    b2 = jax.random.normal(k4, (K, 1, D_out), jnp.float32) * 0.1
    # First weight is 0.0, mirroring FunctionEnsemble.__init__ (weight_list=[0.0]).
    weights = jax.random.normal(k5, (K,), jnp.float32).at[0].set(0.0)

    y_ref = _reference(x, w1, b1, w2, b2, weights)

    # f32 path: tight numerical check against the per-member reference.
    y32 = jax.block_until_ready(
        function_ensemble_forward(x, w1, b1, w2, b2, weights,
                                  compute_dtype=jnp.float32))
    assert y32.shape == (B, D_out)
    assert jnp.allclose(y32, y_ref, atol=1e-5, rtol=1e-5)

    # bf16 inputs + bf16 tanh + f32 MXU accumulation (perf default): loose check.
    ybf = jax.block_until_ready(
        function_ensemble_forward(x, w1, b1, w2, b2, weights,
                                  compute_dtype=jnp.bfloat16))
    assert ybf.shape == (B, D_out)
    assert jnp.allclose(ybf, y_ref, atol=5e-2, rtol=5e-2)

    print("KERNEL_OK")
</pallas_src>

<mosaic_0001>
module attributes {stable_mosaic.version = 11 : i64} {
  func.func @_ensemble_kernel(%arg0: i32, %arg1: memref<8x128xf32, #tpu.memory_space<vmem>>, %arg2: memref<128x128xf32, #tpu.memory_space<vmem>>, %arg3: memref<1x128xf32, #tpu.memory_space<vmem>>, %arg4: memref<128x128xf32, #tpu.memory_space<vmem>>, %arg5: memref<1x128xf32, #tpu.memory_space<vmem>>, %arg6: memref<8x128xf32, #tpu.memory_space<vmem>>) attributes {dimension_semantics = [#tpu.dimension_semantics<parallel>], iteration_bounds = array<i64: 1>, scalar_prefetch = 0 : i64, scratch_operands = 0 : i64, tpu.core_type = #tpu.core_type<tc>, window_params = [{transform_indices = @transform_0, window_bounds = array<i64: 8, 128>}, {pipeline_mode = #tpu.pipeline_mode<synchronous>, transform_indices = @transform_1, window_bounds = array<i64: 128, 128>}, {pipeline_mode = #tpu.pipeline_mode<synchronous>, transform_indices = @transform_2, window_bounds = array<i64: 1, 128>}, {pipeline_mode = #tpu.pipeline_mode<synchronous>, transform_indices = @transform_3, window_bounds = array<i64: 128, 128>}, {pipeline_mode = #tpu.pipeline_mode<synchronous>, transform_indices = @transform_4, window_bounds = array<i64: 1, 128>}, {transform_indices = @transform_5, window_bounds = array<i64: 8, 128>}]} {
    %c0 = arith.constant 0 : index
    %c0_0 = arith.constant 0 : index
    %0 = vector.load %arg1[%c0, %c0_0] : memref<8x128xf32, #tpu.memory_space<vmem>>, vector<8x128xf32>
    %c0_1 = arith.constant 0 : index
    %c0_2 = arith.constant 0 : index
    %1 = vector.load %arg2[%c0_1, %c0_2] : memref<128x128xf32, #tpu.memory_space<vmem>>, vector<128x128xf32>
    %cst = arith.constant dense<0.000000e+00> : vector<8x128xf32>
    %2 = tpu.matmul %0, %1, %cst {dimension_numbers = #tpu.dot_dimension_numbers<[1], [0], [0], [1], [0, 0, 1, 1], [], []>} : vector<8x128xf32>, vector<128x128xf32>, vector<8x128xf32> -> vector<8x128xf32>
    %c0_3 = arith.constant 0 : index
    %c0_4 = arith.constant 0 : index
    %3 = vector.load %arg3[%c0_3, %c0_4] : memref<1x128xf32, #tpu.memory_space<vmem>>, vector<1x128xf32>
    %4 = vector.broadcast %3 : vector<1x128xf32> to vector<8x128xf32>
    %5 = arith.addf %2, %4 : vector<8x128xf32>
    %6 = math.tanh %5 : vector<8x128xf32>
    %c0_5 = arith.constant 0 : index
    %c0_6 = arith.constant 0 : index
    %7 = vector.load %arg4[%c0_5, %c0_6] : memref<128x128xf32, #tpu.memory_space<vmem>>, vector<128x128xf32>
    %cst_7 = arith.constant dense<0.000000e+00> : vector<8x128xf32>
    %8 = tpu.matmul %6, %7, %cst_7 {dimension_numbers = #tpu.dot_dimension_numbers<[1], [0], [0], [1], [0, 0, 1, 1], [], []>} : vector<8x128xf32>, vector<128x128xf32>, vector<8x128xf32> -> vector<8x128xf32>
    %c0_8 = arith.constant 0 : index
    %c0_9 = arith.constant 0 : index
    %9 = vector.load %arg5[%c0_8, %c0_9] : memref<1x128xf32, #tpu.memory_space<vmem>>, vector<1x128xf32>
    %10 = vector.broadcast %9 : vector<1x128xf32> to vector<8x128xf32>
    %11 = arith.addf %8, %10 : vector<8x128xf32>
    %c0_10 = arith.constant 0 : index
    %c0_11 = arith.constant 0 : index
    %12 = vector.load %arg6[%c0_10, %c0_11] : memref<8x128xf32, #tpu.memory_space<vmem>>, vector<8x128xf32>
    tpu.vector_store %arg6[%c0_10, %c0_11], %11 {strides = array<i32>} : memref<8x128xf32, #tpu.memory_space<vmem>>, vector<8x128xf32>,
    return
  }
  func.func @transform_0(%arg0: i32) -> (i32, i32) {
    %c0_i32 = arith.constant 0 : i32
    %c0_i32_0 = arith.constant 0 : i32
    return %arg0, %c0_i32 : i32, i32
  }
  func.func @transform_1(%arg0: i32) -> (i32, i32) {
    %c0_i32 = arith.constant 0 : i32
    %c0_i32_0 = arith.constant 0 : i32
    %c0_i32_1 = arith.constant 0 : i32
    return %c0_i32, %c0_i32_0 : i32, i32
  }
  func.func @transform_2(%arg0: i32) -> (i32, i32) {
    %c0_i32 = arith.constant 0 : i32
    %c0_i32_0 = arith.constant 0 : i32
    %c0_i32_1 = arith.constant 0 : i32
    return %c0_i32, %c0_i32_0 : i32, i32
  }
  func.func @transform_3(%arg0: i32) -> (i32, i32) {
    %c0_i32 = arith.constant 0 : i32
    %c0_i32_0 = arith.constant 0 : i32
    %c0_i32_1 = arith.constant 0 : i32
    return %c0_i32, %c0_i32_0 : i32, i32
  }
  func.func @transform_4(%arg0: i32) -> (i32, i32) {
    %c0_i32 = arith.constant 0 : i32
    %c0_i32_0 = arith.constant 0 : i32
    %c0_i32_1 = arith.constant 0 : i32
    return %c0_i32, %c0_i32_0 : i32, i32
  }
  func.func @transform_5(%arg0: i32) -> (i32, i32) {
    %c0_i32 = arith.constant 0 : i32
    %c0_i32_0 = arith.constant 0 : i32
    return %arg0, %c0_i32 : i32, i32
  }
}

module attributes {stable_mosaic.version = 11 : i64} {
  func.func @_ensemble_kernel(%arg0: i32, %arg1: memref<8x128xf32, #tpu.memory_space<vmem>>, %arg2: memref<128x128xf32, #tpu.memory_space<vmem>>, %arg3: memref<1x128xf32, #tpu.memory_space<vmem>>, %arg4: memref<128x128xf32, #tpu.memory_space<vmem>>, %arg5: memref<1x128xf32, #tpu.memory_space<vmem>>, %arg6: memref<8x128xf32, #tpu.memory_space<vmem>>) attributes {dimension_semantics = [#tpu.dimension_semantics<parallel>], iteration_bounds = array<i64: 1>, scalar_prefetch = 0 : i64, scratch_operands = 0 : i64, tpu.core_type = #tpu.core_type<tc>, window_params = [{transform_indices = @transform_0, window_bounds = array<i64: 8, 128>}, {pipeline_mode = #tpu.pipeline_mode<synchronous>, transform_indices = @transform_1, window_bounds = array<i64: 128, 128>}, {pipeline_mode = #tpu.pipeline_mode<synchronous>, transform_indices = @transform_2, window_bounds = array<i64: 1, 128>}, {pipeline_mode = #tpu.pipeline_mode<synchronous>, transform_indices = @transform_3, window_bounds = array<i64: 128, 128>}, {pipeline_mode = #tpu.pipeline_mode<synchronous>, transform_indices = @transform_4, window_bounds = array<i64: 1, 128>}, {transform_indices = @transform_5, window_bounds = array<i64: 8, 128>}]} {
    %c0 = arith.constant 0 : index
    %c0_0 = arith.constant 0 : index
    %0 = vector.load %arg1[%c0, %c0_0] : memref<8x128xf32, #tpu.memory_space<vmem>>, vector<8x128xf32>
    %c0_1 = arith.constant 0 : index
    %c0_2 = arith.constant 0 : index
    %1 = vector.load %arg2[%c0_1, %c0_2] : memref<128x128xf32, #tpu.memory_space<vmem>>, vector<128x128xf32>
    %cst = arith.constant dense<0.000000e+00> : vector<8x128xf32>
    %2 = tpu.matmul %0, %1, %cst {dimension_numbers = #tpu.dot_dimension_numbers<[1], [0], [0], [1], [0, 0, 1, 1], [], []>} : vector<8x128xf32>, vector<128x128xf32>, vector<8x128xf32> -> vector<8x128xf32>
    %c0_3 = arith.constant 0 : index
    %c0_4 = arith.constant 0 : index
    %3 = vector.load %arg3[%c0_3, %c0_4] : memref<1x128xf32, #tpu.memory_space<vmem>>, vector<1x128xf32>
    %4 = vector.broadcast %3 : vector<1x128xf32> to vector<8x128xf32>
    %5 = arith.addf %2, %4 : vector<8x128xf32>
    %6 = math.tanh %5 : vector<8x128xf32>
    %c0_5 = arith.constant 0 : index
    %c0_6 = arith.constant 0 : index
    %7 = vector.load %arg4[%c0_5, %c0_6] : memref<128x128xf32, #tpu.memory_space<vmem>>, vector<128x128xf32>
    %cst_7 = arith.constant dense<0.000000e+00> : vector<8x128xf32>
    %8 = tpu.matmul %6, %7, %cst_7 {dimension_numbers = #tpu.dot_dimension_numbers<[1], [0], [0], [1], [0, 0, 1, 1], [], []>} : vector<8x128xf32>, vector<128x128xf32>, vector<8x128xf32> -> vector<8x128xf32>
    %c0_8 = arith.constant 0 : index
    %c0_9 = arith.constant 0 : index
    %9 = vector.load %arg5[%c0_8, %c0_9] : memref<1x128xf32, #tpu.memory_space<vmem>>, vector<1x128xf32>
    %10 = vector.broadcast %9 : vector<1x128xf32> to vector<8x128xf32>
    %11 = arith.addf %8, %10 : vector<8x128xf32>
    %c0_10 = arith.constant 0 : index
    %c0_11 = arith.constant 0 : index
    %12 = vector.load %arg6[%c0_10, %c0_11] : memref<8x128xf32, #tpu.memory_space<vmem>>, vector<8x128xf32>
    tpu.vector_store %arg6[%c0_10, %c0_11], %11 {strides = array<i32>} : memref<8x128xf32, #tpu.memory_space<vmem>>, vector<8x128xf32>,
    return
  }
  func.func @transform_0(%arg0: i32) -> (i32, i32) {
    %c0_i32 = arith.constant 0 : i32
    %c0_i32_0 = arith.constant 0 : i32
    return %arg0, %c0_i32 : i32, i32
  }
  func.func @transform_1(%arg0: i32) -> (i32, i32) {
    %c0_i32 = arith.constant 0 : i32
    %c0_i32_0 = arith.constant 0 : i32
    %c0_i32_1 = arith.constant 0 : i32
    return %c0_i32, %c0_i32_0 : i32, i32
  }
  func.func @transform_2(%arg0: i32) -> (i32, i32) {
    %c0_i32 = arith.constant 0 : i32
    %c0_i32_0 = arith.constant 0 : i32
    %c0_i32_1 = arith.constant 0 : i32
    return %c0_i32, %c0_i32_0 : i32, i32
  }
  func.func @transform_3(%arg0: i32) -> (i32, i32) {
    %c0_i32 = arith.constant 0 : i32
    %c0_i32_0 = arith.constant 0 : i32
    %c0_i32_1 = arith.constant 0 : i32
    return %c0_i32, %c0_i32_0 : i32, i32
  }
  func.func @transform_4(%arg0: i32) -> (i32, i32) {
    %c0_i32 = arith.constant 0 : i32
    %c0_i32_0 = arith.constant 0 : i32
    %c0_i32_1 = arith.constant 0 : i32
    return %c0_i32, %c0_i32_0 : i32, i32
  }
  func.func @transform_5(%arg0: i32) -> (i32, i32) {
    %c0_i32 = arith.constant 0 : i32
    %c0_i32_0 = arith.constant 0 : i32
    return %arg0, %c0_i32 : i32, i32
  }
}

</mosaic_0001>

<llo_original>
// kernel: tpu_custom_call.1
$region0: #{tpu_custom_call.1}
  #allocation0 [shape = 'u32[]', space=smem, size = 0x4, offset = 0x4, fixed_abs, tag = 'smem constant byte address 0x4 - core index']
  #allocation1 [shape = 'u32[144,128]{1,0:T(1,128)}', space=vmem, size = 0x12000, scoped, tag = 'internal scratch']
  %s0 = inlined_call_operand.hbm [shape: f32[8,128], index: 0, kind: input, shape index: {}]
  %s1 = inlined_call_operand.hbm [shape: f32[128,128], index: 1, kind: input, shape index: {}]
  %s2 = inlined_call_operand.vmem [shape: f32[1,128], index: 2, kind: input, shape index: {}]
  %s3 = inlined_call_operand.hbm [shape: f32[128,128], index: 3, kind: input, shape index: {}]
  %s4 = inlined_call_operand.vmem [shape: f32[1,128], index: 4, kind: input, shape index: {}]
  %s5 = inlined_call_operand.hbm [shape: f32[8,128], index: 5, kind: output, shape index: {}]
  %s6 = sld [smem:[#allocation0]]
  $region42: #{tpu_custom_call.1} parent=0
    _
  %s8 = ssub.s32 1, %s6
  %s9 = scalar_select 0, %s8, %s6
  $region1: #{tpu_custom_call.1} parent=0
    #allocation2 [shape = 'u8[4096]{0}', space=vmem, size = 0x1000, scoped, tag = 'input window, operand 0, single buffered']
    #allocation3 [shape = 's32[1]{0}', space=sflag, size = 0x4, scoped, tag = 'scoped memory for tpu_custom_call.1']
    #allocation4 [shape = 's32[1]{0}', space=sflag, size = 0x4, scoped, tag = 'scoped memory for tpu_custom_call.1']
    #allocation5 [shape = 'u8[65536]{0}', space=vmem, size = 0x10000, scoped, tag = 'input window, operand 1, single buffered']
    #allocation6 [shape = 's32[1]{0}', space=sflag, size = 0x4, scoped, tag = 'scoped memory for tpu_custom_call.1']
    #allocation7 [shape = 'u8[65536]{0}', space=vmem, size = 0x10000, scoped, tag = 'input window, operand 3, single buffered']
    #allocation8 [shape = 'u8[4096]{0}', space=vmem, size = 0x1000, scoped, tag = 'output window, operand 0, single buffered']
    %10 = vsyncpa [#allocation3], 0
    %11 = vsyncpa [#allocation6], 0
    %12 = vsyncpa [#allocation4], 0
    // Predicated region
    $region2: #{tpu_custom_call.1} parent=1 // pred_check
      _
    $region3: #{tpu_custom_call.1} parent=1 // pred_check_branch
      %14 = sbr.rel (0) target = $region5
    $region4: #{tpu_custom_call.1} parent=1 // pred_region
      %s16 = ssub.s32 128, 128
      %17 = vsyncadd [#allocation3], %s16
      %s19 = sshll.u32 [#allocation2], 4
      %s20 = int_to_ptr.vmem [resolvable:$true] %s19
      %22 = dma.hbm_to_vmem [thread:$0]  %s0, 128, %s20, [#allocation3]
    $region5: #{tpu_custom_call.1} parent=1 // pred_fallthru
      _
    // Predicated region
    $region6: #{tpu_custom_call.1} parent=1 // pred_check
      _
    $region7: #{tpu_custom_call.1} parent=1 // pred_check_branch
      %24 = sbr.rel (0) target = $region9
    $region8: #{tpu_custom_call.1} parent=1 // pred_region
      %s26 = ssub.s32 2048, 2048
      %27 = vsyncadd [#allocation6], %s26
      %s28 = sshll.u32 [#allocation5], 4
      %s29 = int_to_ptr.vmem [resolvable:$true] %s28
      %34 = dma.hbm_to_vmem [thread:$0]  %s1, 2048, %s29, [#allocation6], 128, 128, 8
    $region9: #{tpu_custom_call.1} parent=1 // pred_fallthru
      _
    // Predicated region
    $region10: #{tpu_custom_call.1} parent=1 // pred_check
      _
    $region11: #{tpu_custom_call.1} parent=1 // pred_check_branch
      %36 = sbr.rel (0) target = $region13
    $region12: #{tpu_custom_call.1} parent=1 // pred_region
      _
    $region13: #{tpu_custom_call.1} parent=1 // pred_fallthru
      _
    // Predicated region
    $region14: #{tpu_custom_call.1} parent=1 // pred_check
      _
    $region15: #{tpu_custom_call.1} parent=1 // pred_check_branch
      %38 = sbr.rel (0) target = $region17
    $region16: #{tpu_custom_call.1} parent=1 // pred_region
      %s40 = ssub.s32 2048, 2048
      %41 = vsyncadd [#allocation6], %s40
      %s42 = sshll.u32 [#allocation7], 4
      %s43 = int_to_ptr.vmem [resolvable:$true] %s42
      %48 = dma.hbm_to_vmem [thread:$0]  %s3, 2048, %s43, [#allocation6], 128, 128, 8
    $region17: #{tpu_custom_call.1} parent=1 // pred_fallthru
      _
    // Predicated region
    $region18: #{tpu_custom_call.1} parent=1 // pred_check
      _
    $region19: #{tpu_custom_call.1} parent=1 // pred_check_branch
      %50 = sbr.rel (0) target = $region21
    $region20: #{tpu_custom_call.1} parent=1 // pred_region
      _
    $region21: #{tpu_custom_call.1} parent=1 // pred_fallthru
      _
    // Predicated region
    $region22: #{tpu_custom_call.1} parent=1 // pred_check
      _
    $region23: #{tpu_custom_call.1} parent=1 // pred_check_branch
      %52 = sbr.rel (0) target = $region25
    $region24: #{tpu_custom_call.1} parent=1 // pred_region
      %53 = dma.done [#allocation3], 128
    $region25: #{tpu_custom_call.1} parent=1 // pred_fallthru
      _
    // Predicated region
    $region26: #{tpu_custom_call.1} parent=1 // pred_check
      _
    $region27: #{tpu_custom_call.1} parent=1 // pred_check_branch
      %55 = sbr.rel (0) target = $region29
    $region28: #{tpu_custom_call.1} parent=1 // pred_region
      %56 = dma.done [#allocation6], 2048
    $region29: #{tpu_custom_call.1} parent=1 // pred_fallthru
      _
    // Predicated region
    $region30: #{tpu_custom_call.1} parent=1 // pred_check
      _
    $region31: #{tpu_custom_call.1} parent=1 // pred_check_branch
      %58 = sbr.rel (0) target = $region33
    $region32: #{tpu_custom_call.1} parent=1 // pred_region
      %59 = dma.done [#allocation6], 2048
    $region33: #{tpu_custom_call.1} parent=1 // pred_fallthru
      _
    %v60 = vld [vmem:[#allocation2] sm:$0xff]
    %v61 = vld [vmem:[#allocation5] sm:$0xff]
    %v62 = vld [vmem:[#allocation5 + $0x8] sm:$0xff]
    %v63 = vld [vmem:[#allocation5 + $0x10] sm:$0xff]
    %v64 = vld [vmem:[#allocation5 + $0x18] sm:$0xff]
    %v65 = vld [vmem:[#allocation5 + $0x20] sm:$0xff]
    %v66 = vld [vmem:[#allocation5 + $0x28] sm:$0xff]
    %v67 = vld [vmem:[#allocation5 + $0x30] sm:$0xff]
    %v68 = vld [vmem:[#allocation5 + $0x38] sm:$0xff]
    %v69 = vld [vmem:[#allocation5 + $0x40] sm:$0xff]
    %v70 = vld [vmem:[#allocation5 + $0x48] sm:$0xff]
    %v71 = vld [vmem:[#allocation5 + $0x50] sm:$0xff]
    %v72 = vld [vmem:[#allocation5 + $0x58] sm:$0xff]
    %v73 = vld [vmem:[#allocation5 + $0x60] sm:$0xff]
    %v74 = vld [vmem:[#allocation5 + $0x68] sm:$0xff]
    %v75 = vld [vmem:[#allocation5 + $0x70] sm:$0xff]
    %v76 = vld [vmem:[#allocation5 + $0x78] sm:$0xff]
    %v77 = vld [vmem:[%s2] sm:$0x1]
    %v79 = vlaneseq
    %v80 = vshrl.u32 %v79, 7
    %v81 = vsub.s32 0, %v80
    %v82 = vrot.slane %v77, %v81
    %84 = vmatprep.subr.mxu0 0.0
    %85 = vmatpush1.msra.mxu0 %v61
    %86 = vmatprep.subr.mxu0 0.0
    %87 = vmatpush1.msra.mxu0 %v62
    %88 = vmatprep.subr.mxu0 0.0
    %89 = vmatpush1.msra.mxu0 %v63
    %90 = vmatprep.subr.mxu0 0.0
    %91 = vmatpush1.msra.mxu0 %v64
    %92 = vmatprep.subr.mxu0 0.0
    %93 = vmatpush1.msra.mxu0 %v65
    %94 = vmatprep.subr.mxu0 0.0
    %95 = vmatpush1.msra.mxu0 %v66
    %96 = vmatprep.subr.mxu0 0.0
    %97 = vmatpush1.msra.mxu0 %v67
    %98 = vmatprep.subr.mxu0 0.0
    %99 = vmatpush1.msra.mxu0 %v68
    %100 = vmatprep.subr.mxu0 0.0
    %101 = vmatpush1.msra.mxu0 %v69
    %102 = vmatprep.subr.mxu0 0.0
    %103 = vmatpush1.msra.mxu0 %v70
    %104 = vmatprep.subr.mxu0 0.0
    %105 = vmatpush1.msra.mxu0 %v71
    %106 = vmatprep.subr.mxu0 0.0
    %107 = vmatpush1.msra.mxu0 %v72
    %108 = vmatprep.subr.mxu0 0.0
    %109 = vmatpush1.msra.mxu0 %v73
    %110 = vmatprep.subr.mxu0 0.0
    %111 = vmatpush1.msra.mxu0 %v74
    %112 = vmatprep.subr.mxu0 0.0
    %113 = vmatpush1.msra.mxu0 %v75
    %114 = vmatprep.subr.mxu0 0.0
    %115 = vmatpush1.msra.mxu0 %v76
    %116 = vmatprep.subr.mxu0 0.0
    %117 = vmatpush1.msra.mxu0 0.0
    %118 = vmatprep.subr.mxu0 0.0
    %119 = vmatpush1.msra.mxu0 0.0
    %120 = vmatprep.subr.mxu0 0.0
    %121 = vmatpush1.msra.mxu0 0.0
    %122 = vmatprep.subr.mxu0 0.0
    %123 = vmatpush1.msra.mxu0 0.0
    %124 = vmatprep.subr.mxu0 0.0
    %125 = vmatpush1.msra.mxu0 0.0
    %126 = vmatprep.subr.mxu0 0.0
    %127 = vmatpush1.msra.mxu0 0.0
    %128 = vmatprep.subr.mxu0 0.0
    %129 = vmatpush1.msra.mxu0 0.0
    %130 = vmatprep.subr.mxu0 0.0
    %131 = vmatpush1.msra.mxu0 0.0
    %132 = vmatprep.subr.mxu0 0.0
    %133 = vmatpush1.msra.mxu0 0.0
    %134 = vmatprep.subr.mxu0 0.0
    %135 = vmatpush1.msra.mxu0 0.0
    %136 = vmatprep.subr.mxu0 0.0
    %137 = vmatpush1.msra.mxu0 0.0
    %138 = vmatprep.subr.mxu0 0.0
    %139 = vmatpush1.msra.mxu0 0.0
    %140 = vmatprep.subr.mxu0 0.0
    %141 = vmatpush1.msra.mxu0 0.0
    %142 = vmatprep.subr.mxu0 0.0
    %143 = vmatpush1.msra.mxu0 0.0
    %144 = vmatprep.subr.mxu0 0.0
    %145 = vmatpush1.msra.mxu0 0.0
    %146 = vmatprep.subr.mxu0 0.0
    %147 = vmatpush1.msra.mxu0 0.0
    %148 = vmatprep.mubr.f32.mxu0 0.0
    %149 = vmatmul.mubr.f32.gmra.mrb[0].mxu0 %v60
    %v150 = vpop.f32.mrb[0].mxu0
    %v151 = vadd.f32 %v82, %v150
    %v152 = vpop.f32.mrb[0].mxu0
    %153 = vdwg.mxu0
    %v154 = vtanh.pop %v151
    %v155 = vld [vmem:[#allocation7] sm:$0xff]
    %v156 = vld [vmem:[#allocation7 + $0x8] sm:$0xff]
    %v157 = vld [vmem:[#allocation7 + $0x10] sm:$0xff]
    %v158 = vld [vmem:[#allocation7 + $0x18] sm:$0xff]
    %v159 = vld [vmem:[#allocation7 + $0x20] sm:$0xff]
    %v160 = vld [vmem:[#allocation7 + $0x28] sm:$0xff]
    %v161 = vld [vmem:[#allocation7 + $0x30] sm:$0xff]
    %v162 = vld [vmem:[#allocation7 + $0x38] sm:$0xff]
    %v163 = vld [vmem:[#allocation7 + $0x40] sm:$0xff]
    %v164 = vld [vmem:[#allocation7 + $0x48] sm:$0xff]
    %v165 = vld [vmem:[#allocation7 + $0x50] sm:$0xff]
    %v166 = vld [vmem:[#allocation7 + $0x58] sm:$0xff]
    %v167 = vld [vmem:[#allocation7 + $0x60] sm:$0xff]
    %v168 = vld [vmem:[#allocation7 + $0x68] sm:$0xff]
    %v169 = vld [vmem:[#allocation7 + $0x70] sm:$0xff]
    %v170 = vld [vmem:[#allocation7 + $0x78] sm:$0xff]
    %v171 = vld [vmem:[%s4] sm:$0x1]
    %v173 = vlaneseq
    %v174 = vshrl.u32 %v173, 7
    %v175 = vsub.s32 0, %v174
    %v176 = vrot.slane %v171, %v175
    %178 = vmatprep.subr.mxu0 0.0
    %179 = vmatpush1.msra.mxu0 %v155
    %180 = vmatprep.subr.mxu0 0.0
    %181 = vmatpush1.msra.mxu0 %v156
    %182 = vmatprep.subr.mxu0 0.0
    %183 = vmatpush1.msra.mxu0 %v157
    %184 = vmatprep.subr.mxu0 0.0
    %185 = vmatpush1.msra.mxu0 %v158
    %186 = vmatprep.subr.mxu0 0.0
    %187 = vmatpush1.msra.mxu0 %v159
    %188 = vmatprep.subr.mxu0 0.0
    %189 = vmatpush1.msra.mxu0 %v160
    %190 = vmatprep.subr.mxu0 0.0
    %191 = vmatpush1.msra.mxu0 %v161
    %192 = vmatprep.subr.mxu0 0.0
    %193 = vmatpush1.msra.mxu0 %v162
    %194 = vmatprep.subr.mxu0 0.0
    %195 = vmatpush1.msra.mxu0 %v163
    %196 = vmatprep.subr.mxu0 0.0
    %197 = vmatpush1.msra.mxu0 %v164
    %198 = vmatprep.subr.mxu0 0.0
    %199 = vmatpush1.msra.mxu0 %v165
    %200 = vmatprep.subr.mxu0 0.0
    %201 = vmatpush1.msra.mxu0 %v166
    %202 = vmatprep.subr.mxu0 0.0
    %203 = vmatpush1.msra.mxu0 %v167
    %204 = vmatprep.subr.mxu0 0.0
    %205 = vmatpush1.msra.mxu0 %v168
    %206 = vmatprep.subr.mxu0 0.0
    %207 = vmatpush1.msra.mxu0 %v169
    %208 = vmatprep.subr.mxu0 0.0
    %209 = vmatpush1.msra.mxu0 %v170
    %210 = vmatprep.subr.mxu0 0.0
    %211 = vmatpush1.msra.mxu0 0.0
    %212 = vmatprep.subr.mxu0 0.0
    %213 = vmatpush1.msra.mxu0 0.0
    %214 = vmatprep.subr.mxu0 0.0
    %215 = vmatpush1.msra.mxu0 0.0
    %216 = vmatprep.subr.mxu0 0.0
    %217 = vmatpush1.msra.mxu0 0.0
    %218 = vmatprep.subr.mxu0 0.0
    %219 = vmatpush1.msra.mxu0 0.0
    %220 = vmatprep.subr.mxu0 0.0
    %221 = vmatpush1.msra.mxu0 0.0
    %222 = vmatprep.subr.mxu0 0.0
    %223 = vmatpush1.msra.mxu0 0.0
    %224 = vmatprep.subr.mxu0 0.0
    %225 = vmatpush1.msra.mxu0 0.0
    %226 = vmatprep.subr.mxu0 0.0
    %227 = vmatpush1.msra.mxu0 0.0
    %228 = vmatprep.subr.mxu0 0.0
    %229 = vmatpush1.msra.mxu0 0.0
    %230 = vmatprep.subr.mxu0 0.0
    %231 = vmatpush1.msra.mxu0 0.0
    %232 = vmatprep.subr.mxu0 0.0
    %233 = vmatpush1.msra.mxu0 0.0
    %234 = vmatprep.subr.mxu0 0.0
    %235 = vmatpush1.msra.mxu0 0.0
    %236 = vmatprep.subr.mxu0 0.0
    %237 = vmatpush1.msra.mxu0 0.0
    %238 = vmatprep.subr.mxu0 0.0
    %239 = vmatpush1.msra.mxu0 0.0
    %240 = vmatprep.subr.mxu0 0.0
    %241 = vmatpush1.msra.mxu0 0.0
    %242 = vmatprep.mubr.f32.mxu0 0.0
    %243 = vmatmul.mubr.f32.gmra.mrb[0].mxu0 %v154
    %v244 = vpop.f32.mrb[0].mxu0
    %v245 = vadd.f32 %v176, %v244
    %v246 = vpop.f32.mrb[0].mxu0
    %247 = vdwg.mxu0
    %248 = vst [vmem:[#allocation8] sm:$0xff] %v245
    // Predicated region
    $region34: #{tpu_custom_call.1} parent=1 // pred_check
      _
    $region35: #{tpu_custom_call.1} parent=1 // pred_check_branch
      %250 = sbr.rel (0) target = $region37
    $region36: #{tpu_custom_call.1} parent=1 // pred_region
      %s252 = ssub.s32 128, 128
      %253 = vsyncadd [#allocation4], %s252
      %s255 = sshll.u32 [#allocation8], 4
      %s256 = int_to_ptr.vmem [resolvable:$true] %s255
      %258 = dma.vmem_to_hbm [thread:$0]  %s256, 128, %s5, [#allocation4]
    $region37: #{tpu_custom_call.1} parent=1 // pred_fallthru
      _
    // Predicated region
    $region38: #{tpu_custom_call.1} parent=1 // pred_check
      _
    $region39: #{tpu_custom_call.1} parent=1 // pred_check_branch
      %260 = sbr.rel (0) target = $region41
    $region40: #{tpu_custom_call.1} parent=1 // pred_region
      %261 = dma.done [#allocation4], 128
    $region41: #{tpu_custom_call.1} parent=1 // pred_fallthru
      _
    %262 = vsyncpa [#allocation3], 1
    %263 = vsyncpa [#allocation6], 1
    %264 = vsyncpa [#allocation4], 1

// kernel: tpu_custom_call.1
$region0: #{tpu_custom_call.1}
  #allocation0 [shape = 'u32[]', space=smem, size = 0x4, offset = 0x4, fixed_abs, tag = 'smem constant byte address 0x4 - core index']
  #allocation1 [shape = 'u32[144,128]{1,0:T(1,128)}', space=vmem, size = 0x12000, scoped, tag = 'internal scratch']
  %s0 = inlined_call_operand.hbm [shape: f32[8,128], index: 0, kind: input, shape index: {}]
  %s1 = inlined_call_operand.hbm [shape: f32[128,128], index: 1, kind: input, shape index: {}]
  %s2 = inlined_call_operand.vmem [shape: f32[1,128], index: 2, kind: input, shape index: {}]
  %s3 = inlined_call_operand.hbm [shape: f32[128,128], index: 3, kind: input, shape index: {}]
  %s4 = inlined_call_operand.vmem [shape: f32[1,128], index: 4, kind: input, shape index: {}]
  %s5 = inlined_call_operand.hbm [shape: f32[8,128], index: 5, kind: output, shape index: {}]
  %s6 = sld [smem:[#allocation0]]
  $region42: #{tpu_custom_call.1} parent=0
    _
  %s8 = ssub.s32 1, %s6
  %s9 = scalar_select 0, %s8, %s6
  $region1: #{tpu_custom_call.1} parent=0
    #allocation2 [shape = 'u8[4096]{0}', space=vmem, size = 0x1000, scoped, tag = 'input window, operand 0, single buffered']
    #allocation3 [shape = 's32[1]{0}', space=sflag, size = 0x4, scoped, tag = 'scoped memory for tpu_custom_call.1']
    #allocation4 [shape = 's32[1]{0}', space=sflag, size = 0x4, scoped, tag = 'scoped memory for tpu_custom_call.1']
    #allocation5 [shape = 'u8[65536]{0}', space=vmem, size = 0x10000, scoped, tag = 'input window, operand 1, single buffered']
    #allocation6 [shape = 's32[1]{0}', space=sflag, size = 0x4, scoped, tag = 'scoped memory for tpu_custom_call.1']
    #allocation7 [shape = 'u8[65536]{0}', space=vmem, size = 0x10000, scoped, tag = 'input window, operand 3, single buffered']
    #allocation8 [shape = 'u8[4096]{0}', space=vmem, size = 0x1000, scoped, tag = 'output window, operand 0, single buffered']
    %10 = vsyncpa [#allocation3], 0
    %11 = vsyncpa [#allocation6], 0
    %12 = vsyncpa [#allocation4], 0
    // Predicated region
    $region2: #{tpu_custom_call.1} parent=1 // pred_check
      _
    $region3: #{tpu_custom_call.1} parent=1 // pred_check_branch
      %14 = sbr.rel (0) target = $region5
    $region4: #{tpu_custom_call.1} parent=1 // pred_region
      %s16 = ssub.s32 128, 128
      %17 = vsyncadd [#allocation3], %s16
      %s19 = sshll.u32 [#allocation2], 4
      %s20 = int_to_ptr.vmem [resolvable:$true] %s19
      %22 = dma.hbm_to_vmem [thread:$0]  %s0, 128, %s20, [#allocation3]
    $region5: #{tpu_custom_call.1} parent=1 // pred_fallthru
      _
    // Predicated region
    $region6: #{tpu_custom_call.1} parent=1 // pred_check
      _
    $region7: #{tpu_custom_call.1} parent=1 // pred_check_branch
      %24 = sbr.rel (0) target = $region9
    $region8: #{tpu_custom_call.1} parent=1 // pred_region
      %s26 = ssub.s32 2048, 2048
      %27 = vsyncadd [#allocation6], %s26
      %s28 = sshll.u32 [#allocation5], 4
      %s29 = int_to_ptr.vmem [resolvable:$true] %s28
      %34 = dma.hbm_to_vmem [thread:$0]  %s1, 2048, %s29, [#allocation6], 128, 128, 8
    $region9: #{tpu_custom_call.1} parent=1 // pred_fallthru
      _
    // Predicated region
    $region10: #{tpu_custom_call.1} parent=1 // pred_check
      _
    $region11: #{tpu_custom_call.1} parent=1 // pred_check_branch
      %36 = sbr.rel (0) target = $region13
    $region12: #{tpu_custom_call.1} parent=1 // pred_region
      _
    $region13: #{tpu_custom_call.1} parent=1 // pred_fallthru
      _
    // Predicated region
    $region14: #{tpu_custom_call.1} parent=1 // pred_check
      _
    $region15: #{tpu_custom_call.1} parent=1 // pred_check_branch
      %38 = sbr.rel (0) target = $region17
    $region16: #{tpu_custom_call.1} parent=1 // pred_region
      %s40 = ssub.s32 2048, 2048
      %41 = vsyncadd [#allocation6], %s40
      %s42 = sshll.u32 [#allocation7], 4
      %s43 = int_to_ptr.vmem [resolvable:$true] %s42
      %48 = dma.hbm_to_vmem [thread:$0]  %s3, 2048, %s43, [#allocation6], 128, 128, 8
    $region17: #{tpu_custom_call.1} parent=1 // pred_fallthru
      _
    // Predicated region
    $region18: #{tpu_custom_call.1} parent=1 // pred_check
      _
    $region19: #{tpu_custom_call.1} parent=1 // pred_check_branch
      %50 = sbr.rel (0) target = $region21
    $region20: #{tpu_custom_call.1} parent=1 // pred_region
      _
    $region21: #{tpu_custom_call.1} parent=1 // pred_fallthru
      _
    // Predicated region
    $region22: #{tpu_custom_call.1} parent=1 // pred_check
      _
    $region23: #{tpu_custom_call.1} parent=1 // pred_check_branch
      %52 = sbr.rel (0) target = $region25
    $region24: #{tpu_custom_call.1} parent=1 // pred_region
      %53 = dma.done [#allocation3], 128
    $region25: #{tpu_custom_call.1} parent=1 // pred_fallthru
      _
    // Predicated region
    $region26: #{tpu_custom_call.1} parent=1 // pred_check
      _
    $region27: #{tpu_custom_call.1} parent=1 // pred_check_branch
      %55 = sbr.rel (0) target = $region29
    $region28: #{tpu_custom_call.1} parent=1 // pred_region
      %56 = dma.done [#allocation6], 2048
    $region29: #{tpu_custom_call.1} parent=1 // pred_fallthru
      _
    // Predicated region
    $region30: #{tpu_custom_call.1} parent=1 // pred_check
      _
    $region31: #{tpu_custom_call.1} parent=1 // pred_check_branch
      %58 = sbr.rel (0) target = $region33
    $region32: #{tpu_custom_call.1} parent=1 // pred_region
      %59 = dma.done [#allocation6], 2048
    $region33: #{tpu_custom_call.1} parent=1 // pred_fallthru
      _
    %v60 = vld [vmem:[#allocation2] sm:$0xff]
    %v61 = vld [vmem:[#allocation5] sm:$0xff]
    %v62 = vld [vmem:[#allocation5 + $0x8] sm:$0xff]
    %v63 = vld [vmem:[#allocation5 + $0x10] sm:$0xff]
    %v64 = vld [vmem:[#allocation5 + $0x18] sm:$0xff]
    %v65 = vld [vmem:[#allocation5 + $0x20] sm:$0xff]
    %v66 = vld [vmem:[#allocation5 + $0x28] sm:$0xff]
    %v67 = vld [vmem:[#allocation5 + $0x30] sm:$0xff]
    %v68 = vld [vmem:[#allocation5 + $0x38] sm:$0xff]
    %v69 = vld [vmem:[#allocation5 + $0x40] sm:$0xff]
    %v70 = vld [vmem:[#allocation5 + $0x48] sm:$0xff]
    %v71 = vld [vmem:[#allocation5 + $0x50] sm:$0xff]
    %v72 = vld [vmem:[#allocation5 + $0x58] sm:$0xff]
    %v73 = vld [vmem:[#allocation5 + $0x60] sm:$0xff]
    %v74 = vld [vmem:[#allocation5 + $0x68] sm:$0xff]
    %v75 = vld [vmem:[#allocation5 + $0x70] sm:$0xff]
    %v76 = vld [vmem:[#allocation5 + $0x78] sm:$0xff]
    %v77 = vld [vmem:[%s2] sm:$0x1]
    %v79 = vlaneseq
    %v80 = vshrl.u32 %v79, 7
    %v81 = vsub.s32 0, %v80
    %v82 = vrot.slane %v77, %v81
    %84 = vmatprep.subr.mxu0 0.0
    %85 = vmatpush1.msra.mxu0 %v61
    %86 = vmatprep.subr.mxu0 0.0
    %87 = vmatpush1.msra.mxu0 %v62
    %88 = vmatprep.subr.mxu0 0.0
    %89 = vmatpush1.msra.mxu0 %v63
    %90 = vmatprep.subr.mxu0 0.0
    %91 = vmatpush1.msra.mxu0 %v64
    %92 = vmatprep.subr.mxu0 0.0
    %93 = vmatpush1.msra.mxu0 %v65
    %94 = vmatprep.subr.mxu0 0.0
    %95 = vmatpush1.msra.mxu0 %v66
    %96 = vmatprep.subr.mxu0 0.0
    %97 = vmatpush1.msra.mxu0 %v67
    %98 = vmatprep.subr.mxu0 0.0
    %99 = vmatpush1.msra.mxu0 %v68
    %100 = vmatprep.subr.mxu0 0.0
    %101 = vmatpush1.msra.mxu0 %v69
    %102 = vmatprep.subr.mxu0 0.0
    %103 = vmatpush1.msra.mxu0 %v70
    %104 = vmatprep.subr.mxu0 0.0
    %105 = vmatpush1.msra.mxu0 %v71
    %106 = vmatprep.subr.mxu0 0.0
    %107 = vmatpush1.msra.mxu0 %v72
    %108 = vmatprep.subr.mxu0 0.0
    %109 = vmatpush1.msra.mxu0 %v73
    %110 = vmatprep.subr.mxu0 0.0
    %111 = vmatpush1.msra.mxu0 %v74
    %112 = vmatprep.subr.mxu0 0.0
    %113 = vmatpush1.msra.mxu0 %v75
    %114 = vmatprep.subr.mxu0 0.0
    %115 = vmatpush1.msra.mxu0 %v76
    %116 = vmatprep.subr.mxu0 0.0
    %117 = vmatpush1.msra.mxu0 0.0
    %118 = vmatprep.subr.mxu0 0.0
    %119 = vmatpush1.msra.mxu0 0.0
    %120 = vmatprep.subr.mxu0 0.0
    %121 = vmatpush1.msra.mxu0 0.0
    %122 = vmatprep.subr.mxu0 0.0
    %123 = vmatpush1.msra.mxu0 0.0
    %124 = vmatprep.subr.mxu0 0.0
    %125 = vmatpush1.msra.mxu0 0.0
    %126 = vmatprep.subr.mxu0 0.0
    %127 = vmatpush1.msra.mxu0 0.0
    %128 = vmatprep.subr.mxu0 0.0
    %129 = vmatpush1.msra.mxu0 0.0
    %130 = vmatprep.subr.mxu0 0.0
    %131 = vmatpush1.msra.mxu0 0.0
    %132 = vmatprep.subr.mxu0 0.0
    %133 = vmatpush1.msra.mxu0 0.0
    %134 = vmatprep.subr.mxu0 0.0
    %135 = vmatpush1.msra.mxu0 0.0
    %136 = vmatprep.subr.mxu0 0.0
    %137 = vmatpush1.msra.mxu0 0.0
    %138 = vmatprep.subr.mxu0 0.0
    %139 = vmatpush1.msra.mxu0 0.0
    %140 = vmatprep.subr.mxu0 0.0
    %141 = vmatpush1.msra.mxu0 0.0
    %142 = vmatprep.subr.mxu0 0.0
    %143 = vmatpush1.msra.mxu0 0.0
    %144 = vmatprep.subr.mxu0 0.0
    %145 = vmatpush1.msra.mxu0 0.0
    %146 = vmatprep.subr.mxu0 0.0
    %147 = vmatpush1.msra.mxu0 0.0
    %148 = vmatprep.mubr.f32.mxu0 0.0
    %149 = vmatmul.mubr.f32.gmra.mrb[0].mxu0 %v60
    %v150 = vpop.f32.mrb[0].mxu0
    %v151 = vadd.f32 %v82, %v150
    %v152 = vpop.f32.mrb[0].mxu0
    %153 = vdwg.mxu0
    %v154 = vtanh.pop %v151
    %v155 = vld [vmem:[#allocation7] sm:$0xff]
    %v156 = vld [vmem:[#allocation7 + $0x8] sm:$0xff]
    %v157 = vld [vmem:[#allocation7 + $0x10] sm:$0xff]
    %v158 = vld [vmem:[#allocation7 + $0x18] sm:$0xff]
    %v159 = vld [vmem:[#allocation7 + $0x20] sm:$0xff]
    %v160 = vld [vmem:[#allocation7 + $0x28] sm:$0xff]
    %v161 = vld [vmem:[#allocation7 + $0x30] sm:$0xff]
    %v162 = vld [vmem:[#allocation7 + $0x38] sm:$0xff]
    %v163 = vld [vmem:[#allocation7 + $0x40] sm:$0xff]
    %v164 = vld [vmem:[#allocation7 + $0x48] sm:$0xff]
    %v165 = vld [vmem:[#allocation7 + $0x50] sm:$0xff]
    %v166 = vld [vmem:[#allocation7 + $0x58] sm:$0xff]
    %v167 = vld [vmem:[#allocation7 + $0x60] sm:$0xff]
    %v168 = vld [vmem:[#allocation7 + $0x68] sm:$0xff]
    %v169 = vld [vmem:[#allocation7 + $0x70] sm:$0xff]
    %v170 = vld [vmem:[#allocation7 + $0x78] sm:$0xff]
    %v171 = vld [vmem:[%s4] sm:$0x1]
    %v173 = vlaneseq
    %v174 = vshrl.u32 %v173, 7
    %v175 = vsub.s32 0, %v174
    %v176 = vrot.slane %v171, %v175
    %178 = vmatprep.subr.mxu0 0.0
    %179 = vmatpush1.msra.mxu0 %v155
    %180 = vmatprep.subr.mxu0 0.0
    %181 = vmatpush1.msra.mxu0 %v156
    %182 = vmatprep.subr.mxu0 0.0
    %183 = vmatpush1.msra.mxu0 %v157
    %184 = vmatprep.subr.mxu0 0.0
    %185 = vmatpush1.msra.mxu0 %v158
    %186 = vmatprep.subr.mxu0 0.0
    %187 = vmatpush1.msra.mxu0 %v159
    %188 = vmatprep.subr.mxu0 0.0
    %189 = vmatpush1.msra.mxu0 %v160
    %190 = vmatprep.subr.mxu0 0.0
    %191 = vmatpush1.msra.mxu0 %v161
    %192 = vmatprep.subr.mxu0 0.0
    %193 = vmatpush1.msra.mxu0 %v162
    %194 = vmatprep.subr.mxu0 0.0
    %195 = vmatpush1.msra.mxu0 %v163
    %196 = vmatprep.subr.mxu0 0.0
    %197 = vmatpush1.msra.mxu0 %v164
    %198 = vmatprep.subr.mxu0 0.0
    %199 = vmatpush1.msra.mxu0 %v165
    %200 = vmatprep.subr.mxu0 0.0
    %201 = vmatpush1.msra.mxu0 %v166
    %202 = vmatprep.subr.mxu0 0.0
    %203 = vmatpush1.msra.mxu0 %v167
    %204 = vmatprep.subr.mxu0 0.0
    %205 = vmatpush1.msra.mxu0 %v168
    %206 = vmatprep.subr.mxu0 0.0
    %207 = vmatpush1.msra.mxu0 %v169
    %208 = vmatprep.subr.mxu0 0.0
    %209 = vmatpush1.msra.mxu0 %v170
    %210 = vmatprep.subr.mxu0 0.0
    %211 = vmatpush1.msra.mxu0 0.0
    %212 = vmatprep.subr.mxu0 0.0
    %213 = vmatpush1.msra.mxu0 0.0
    %214 = vmatprep.subr.mxu0 0.0
    %215 = vmatpush1.msra.mxu0 0.0
    %216 = vmatprep.subr.mxu0 0.0
    %217 = vmatpush1.msra.mxu0 0.0
    %218 = vmatprep.subr.mxu0 0.0
    %219 = vmatpush1.msra.mxu0 0.0
    %220 = vmatprep.subr.mxu0 0.0
    %221 = vmatpush1.msra.mxu0 0.0
    %222 = vmatprep.subr.mxu0 0.0
    %223 = vmatpush1.msra.mxu0 0.0
    %224 = vmatprep.subr.mxu0 0.0
    %225 = vmatpush1.msra.mxu0 0.0
    %226 = vmatprep.subr.mxu0 0.0
    %227 = vmatpush1.msra.mxu0 0.0
    %228 = vmatprep.subr.mxu0 0.0
    %229 = vmatpush1.msra.mxu0 0.0
    %230 = vmatprep.subr.mxu0 0.0
    %231 = vmatpush1.msra.mxu0 0.0
    %232 = vmatprep.subr.mxu0 0.0
    %233 = vmatpush1.msra.mxu0 0.0
    %234 = vmatprep.subr.mxu0 0.0
    %235 = vmatpush1.msra.mxu0 0.0
    %236 = vmatprep.subr.mxu0 0.0
    %237 = vmatpush1.msra.mxu0 0.0
    %238 = vmatprep.subr.mxu0 0.0
    %239 = vmatpush1.msra.mxu0 0.0
    %240 = vmatprep.subr.mxu0 0.0
    %241 = vmatpush1.msra.mxu0 0.0
    %242 = vmatprep.mubr.f32.mxu0 0.0
    %243 = vmatmul.mubr.f32.gmra.mrb[0].mxu0 %v154
    %v244 = vpop.f32.mrb[0].mxu0
    %v245 = vadd.f32 %v176, %v244
    %v246 = vpop.f32.mrb[0].mxu0
    %247 = vdwg.mxu0
    %248 = vst [vmem:[#allocation8] sm:$0xff] %v245
    // Predicated region
    $region34: #{tpu_custom_call.1} parent=1 // pred_check
      _
    $region35: #{tpu_custom_call.1} parent=1 // pred_check_branch
      %250 = sbr.rel (0) target = $region37
    $region36: #{tpu_custom_call.1} parent=1 // pred_region
      %s252 = ssub.s32 128, 128
      %253 = vsyncadd [#allocation4], %s252
      %s255 = sshll.u32 [#allocation8], 4
      %s256 = int_to_ptr.vmem [resolvable:$true] %s255
      %258 = dma.vmem_to_hbm [thread:$0]  %s256, 128, %s5, [#allocation4]
    $region37: #{tpu_custom_call.1} parent=1 // pred_fallthru
      _
    // Predicated region
    $region38: #{tpu_custom_call.1} parent=1 // pred_check
      _
    $region39: #{tpu_custom_call.1} parent=1 // pred_check_branch
      %260 = sbr.rel (0) target = $region41
    $region40: #{tpu_custom_call.1} parent=1 // pred_region
      %261 = dma.done [#allocation4], 128
    $region41: #{tpu_custom_call.1} parent=1 // pred_fallthru
      _
    %262 = vsyncpa [#allocation3], 1
    %263 = vsyncpa [#allocation6], 1
    %264 = vsyncpa [#allocation4], 1

</llo_original>
